<compile_context>
chip_gen: v5e
topology: v5e:2x2
jax: 0.10.0
libtpu: 0.0.40
codegen_flags: <defaults>
</compile_context>

<pallas_src>
import math

import jax
import jax.numpy as jnp
from jax.experimental import pallas as pl
from jax.experimental.pallas import tpu as pltpu


def _drop_path_kernel(w_ref, x_ref, o_ref):
    # w_ref: (TN, 1, 1) per-sample weights (already in x.dtype, already scaled).
    # x_ref / o_ref: (TN, tile_s, 128) lane-dense blocks.
    o_ref[...] = x_ref[...] * w_ref[...]


def drop_path_block(x, *, drop_path_prob=0.0, scale_by_keep=True,
                    training=False, key=None, target_block_bytes=1 << 20):
    """DropPath forward. x: (N, ...). Returns array with same shape/dtype."""
    assert drop_path_prob >= 0.0
    keep_prob = 1.0 - drop_path_prob

    # Fast path, identical to the PyTorch module: no compute at all.
    if drop_path_prob == 0.0 or not training:
        return x

    if key is None:
        key = jax.random.PRNGKey(0)

    N = x.shape[0]
    F = math.prod(x.shape[1:])
    LANE = 128
    itemsize = jnp.dtype(x.dtype).itemsize
    sub = max(8, 32 // itemsize)  # dtype-aware sublane multiple (f32:8, bf16:16, i8:32)

    # Per-sample Bernoulli(keep_prob), optionally scaled by 1/keep_prob.
    scale = (1.0 / keep_prob) if (scale_by_keep and keep_prob > 0.0) else 1.0
    keep = jax.random.bernoulli(key, p=keep_prob, shape=(N,))
    w = (keep.astype(jnp.float32) * jnp.float32(scale)).astype(x.dtype)
    w3 = w.reshape(N, 1, 1)

    # View x as (N, S, 128); pad the flattened feature axis only when needed.
    S = pl.cdiv(F, LANE)
    F_pad = S * LANE
    x2 = x.reshape(N, F)
    if F_pad != F:
        x2 = jnp.pad(x2, ((0, 0), (0, F_pad - F)))
    x3 = x2.reshape(N, S, LANE)

    # Tile selection: ~target_block_bytes per block. Pack multiple samples per
    # block when per-sample features are small; tile the S axis when large.
    target_rows = max(sub, target_block_bytes // (LANE * itemsize))
    if S >= target_rows:
        tile_s = target_rows              # multiple of `sub` by construction
        TN = 1
    else:
        tile_s = S                        # full axis -> no alignment constraint
        TN = min(N, max(1, target_rows // S))

    grid = (pl.cdiv(N, TN), pl.cdiv(S, tile_s))  # ragged last blocks are masked

    out = pl.pallas_call(
        _drop_path_kernel,
        out_shape=jax.ShapeDtypeStruct((N, S, LANE), x.dtype),
        grid=grid,
        in_specs=[
            pl.BlockSpec((TN, 1, 1), lambda n, t: (n, 0, 0)),
            pl.BlockSpec((TN, tile_s, LANE), lambda n, t: (n, t, 0)),
        ],
        out_specs=pl.BlockSpec((TN, tile_s, LANE), lambda n, t: (n, t, 0)),
        compiler_params=pltpu.CompilerParams(
            dimension_semantics=("parallel", "parallel")),
    )(w3, x3)

    if F_pad != F:
        out = out.reshape(N, F_pad)[:, :F]
    return out.reshape(x.shape)


if __name__ == "__main__":
    # Shapes consistent with the module's typical use: N=2, C=4, H=W=16.
    N, C, H, W = 2, 4, 16, 16
    key = jax.random.PRNGKey(0)
    x = jax.random.normal(key, (N, C, H, W), jnp.float32)

    # Path 1: module default (drop_path_prob=0.0) / eval -> exact identity.
    y_id = drop_path_block(x, drop_path_prob=0.0, training=False)
    assert y_id is x

    # Path 2: training with drop_path_prob > 0 -> per-sample Bernoulli scaling.
    drop_p = 0.25
    keep_p = 1.0 - drop_p
    rng_key = jax.random.PRNGKey(1234)
    y = drop_path_block(x, drop_path_prob=drop_p, scale_by_keep=True,
                        training=True, key=rng_key)
    y = jax.block_until_ready(y)
    assert y.shape == x.shape and y.dtype == x.dtype

    # Exact reference with the same key (same Bernoulli draw).
    keep_ref = jax.random.bernoulli(rng_key, p=keep_p, shape=(N,))
    w_ref = (keep_ref.astype(jnp.float32) / keep_p).astype(x.dtype)
    ref = x * w_ref.reshape(N, 1, 1, 1)
    assert jnp.allclose(y, ref, rtol=1e-6, atol=1e-6)

    # Structural check: each sample is either fully dropped (all zeros) or kept
    # and rescaled by exactly 1/keep_prob (torch's scale_by_keep behaviour).
    for b in range(N):
        dropped = bool(jnp.allclose(y[b], 0.0, atol=0.0))
        kept = bool(jnp.allclose(y[b], x[b] / keep_p, rtol=1e-6, atol=1e-6))
        assert dropped or kept, f"sample {b}: not a valid drop-path output"

    print("KERNEL_OK")
</pallas_src>

<mosaic_0001>
module attributes {stable_mosaic.version = 11 : i64} {
  func.func @_drop_path_kernel(%arg0: i32, %arg1: i32, %arg2: memref<2x1x1xf32, #tpu.memory_space<vmem>>, %arg3: memref<2x8x128xf32, #tpu.memory_space<vmem>>, %arg4: memref<2x8x128xf32, #tpu.memory_space<vmem>>) attributes {dimension_semantics = [#tpu.dimension_semantics<parallel>, #tpu.dimension_semantics<parallel>], iteration_bounds = array<i64: 1, 1>, scalar_prefetch = 0 : i64, scratch_operands = 0 : i64, tpu.core_type = #tpu.core_type<tc>, window_params = [{transform_indices = @transform_0, window_bounds = array<i64: 2, 1, 1>}, {transform_indices = @transform_1, window_bounds = array<i64: 2, 8, 128>}, {transform_indices = @transform_2, window_bounds = array<i64: 2, 8, 128>}]} {
    %c0 = arith.constant 0 : index
    %c0_0 = arith.constant 0 : index
    %c0_1 = arith.constant 0 : index
    %0 = vector.load %arg3[%c0, %c0_0, %c0_1] : memref<2x8x128xf32, #tpu.memory_space<vmem>>, vector<2x8x128xf32>
    %c0_2 = arith.constant 0 : index
    %c0_3 = arith.constant 0 : index
    %c0_4 = arith.constant 0 : index
    %1 = vector.load %arg2[%c0_2, %c0_3, %c0_4] : memref<2x1x1xf32, #tpu.memory_space<vmem>>, vector<2x1x1xf32>
    %2 = vector.broadcast %1 : vector<2x1x1xf32> to vector<2x8x128xf32>
    %3 = arith.mulf %0, %2 : vector<2x8x128xf32>
    %c0_5 = arith.constant 0 : index
    %c0_6 = arith.constant 0 : index
    %c0_7 = arith.constant 0 : index
    %4 = vector.load %arg4[%c0_5, %c0_6, %c0_7] : memref<2x8x128xf32, #tpu.memory_space<vmem>>, vector<2x8x128xf32>
    tpu.vector_store %arg4[%c0_5, %c0_6, %c0_7], %3 {strides = array<i32>} : memref<2x8x128xf32, #tpu.memory_space<vmem>>, vector<2x8x128xf32>,
    return
  }
  func.func @transform_0(%arg0: i32, %arg1: i32) -> (i32, i32, i32) {
    %c0_i32 = arith.constant 0 : i32
    %c0_i32_0 = arith.constant 0 : i32
    %c0_i32_1 = arith.constant 0 : i32
    return %arg0, %c0_i32, %c0_i32_0 : i32, i32, i32
  }
  func.func @transform_1(%arg0: i32, %arg1: i32) -> (i32, i32, i32) {
    %c0_i32 = arith.constant 0 : i32
    %c0_i32_0 = arith.constant 0 : i32
    return %arg0, %arg1, %c0_i32 : i32, i32, i32
  }
  func.func @transform_2(%arg0: i32, %arg1: i32) -> (i32, i32, i32) {
    %c0_i32 = arith.constant 0 : i32
    %c0_i32_0 = arith.constant 0 : i32
    return %arg0, %arg1, %c0_i32 : i32, i32, i32
  }
}

</mosaic_0001>

<llo_original>
// kernel: tpu_custom_call.1
$region0: #{tpu_custom_call.1}
  #allocation0 [shape = 'u32[]', space=smem, size = 0x4, offset = 0x4, fixed_abs, tag = 'smem constant byte address 0x4 - core index']
  #allocation1 [shape = 'u32[72,128]{1,0:T(1,128)}', space=vmem, size = 0x9000, scoped, tag = 'internal scratch']
  %s0 = inlined_call_operand.vmem [shape: f32[2,1,1], index: 0, kind: input, shape index: {}]
  %s1 = inlined_call_operand.hbm [shape: f32[2,8,128], index: 1, kind: input, shape index: {}]
  %s2 = inlined_call_operand.hbm [shape: f32[2,8,128], index: 2, kind: output, shape index: {}]
  %s3 = sld [smem:[#allocation0]]
  $region22: #{tpu_custom_call.1} parent=0
    _
  %s5 = ssub.s32 1, %s3
  %s6 = scalar_select 0, %s5, %s3
  $region1: #{tpu_custom_call.1} parent=0
    #allocation2 [shape = 'u8[8192]{0}', space=vmem, size = 0x2000, scoped, tag = 'input window, operand 1, single buffered']
    #allocation3 [shape = 's32[1]{0}', space=sflag, size = 0x4, scoped, tag = 'scoped memory for tpu_custom_call.1']
    #allocation4 [shape = 's32[1]{0}', space=sflag, size = 0x4, scoped, tag = 'scoped memory for tpu_custom_call.1']
    #allocation5 [shape = 'u8[8192]{0}', space=vmem, size = 0x2000, scoped, tag = 'output window, operand 0, single buffered']
    %7 = vsyncpa [#allocation3], 0
    %8 = vsyncpa [#allocation4], 0
    // Predicated region
    $region2: #{tpu_custom_call.1} parent=1 // pred_check
      _
    $region3: #{tpu_custom_call.1} parent=1 // pred_check_branch
      %10 = sbr.rel (0) target = $region5
    $region4: #{tpu_custom_call.1} parent=1 // pred_region
      _
    $region5: #{tpu_custom_call.1} parent=1 // pred_fallthru
      _
    // Predicated region
    $region6: #{tpu_custom_call.1} parent=1 // pred_check
      _
    $region7: #{tpu_custom_call.1} parent=1 // pred_check_branch
      %12 = sbr.rel (0) target = $region9
    $region8: #{tpu_custom_call.1} parent=1 // pred_region
      %14 = vsyncadd [#allocation3], 0
      %s15 = sshll.u32 %s1, 4
      %s16 = int_to_ptr.hbm [resolvable:$true] %s15
      %s17 = sshll.u32 [#allocation2], 4
      %s18 = int_to_ptr.vmem [resolvable:$true] %s17
      %23 = dma.hbm_to_vmem [thread:$0]  %s16, 256, %s18, [#allocation3], 128, 128, 8
    $region9: #{tpu_custom_call.1} parent=1 // pred_fallthru
      _
    // Predicated region
    $region10: #{tpu_custom_call.1} parent=1 // pred_check
      _
    $region11: #{tpu_custom_call.1} parent=1 // pred_check_branch
      %25 = sbr.rel (0) target = $region13
    $region12: #{tpu_custom_call.1} parent=1 // pred_region
      %27 = dma.done [#allocation3], 256
    $region13: #{tpu_custom_call.1} parent=1 // pred_fallthru
      _
    %v28 = vld [vmem:[#allocation2] sm:$0xff]
    %v29 = vld [vmem:[#allocation2 + $0x8] sm:$0xff]
    %v30 = vld [vmem:[%s0] sm:$0x1]
    %v31 = vld [vmem:[%s0 + $0x1] sm:$0x1]
    %v34 = vperm.slane %v30, 0
    %v35 = vperm.slane %v31, 0
    %36 = vset.pattern.permute.xlu0 0
    %37 = vperm.xlu0 %36, %v34
    %v38 = vpop.permute.xlu0 %37
    %40 = vset.pattern.permute.xlu0 0
    %41 = vperm.xlu0 %40, %v35
    %v42 = vpop.permute.xlu0 %41
    %v44 = vmul.f32 %v28, %v38
    %v45 = vmul.f32 %v29, %v42
    %46 = vst [vmem:[#allocation5] sm:$0xff] %v44
    %47 = vst [vmem:[#allocation5 + $0x8] sm:$0xff] %v45
    // Predicated region
    $region14: #{tpu_custom_call.1} parent=1 // pred_check
      _
    $region15: #{tpu_custom_call.1} parent=1 // pred_check_branch
      %49 = sbr.rel (0) target = $region17
    $region16: #{tpu_custom_call.1} parent=1 // pred_region
      %51 = vsyncadd [#allocation4], 0
      %s52 = sshll.u32 [#allocation5], 4
      %s53 = int_to_ptr.vmem [resolvable:$true] %s52
      %s54 = sshll.u32 %s2, 4
      %s55 = int_to_ptr.hbm [resolvable:$true] %s54
      %60 = dma.vmem_to_hbm [thread:$0]  %s53, 256, %s55, [#allocation4], 128, 128, 8
    $region17: #{tpu_custom_call.1} parent=1 // pred_fallthru
      _
    // Predicated region
    $region18: #{tpu_custom_call.1} parent=1 // pred_check
      _
    $region19: #{tpu_custom_call.1} parent=1 // pred_check_branch
      %62 = sbr.rel (0) target = $region21
    $region20: #{tpu_custom_call.1} parent=1 // pred_region
      %64 = dma.done [#allocation4], 256
    $region21: #{tpu_custom_call.1} parent=1 // pred_fallthru
      _
    %65 = vsyncpa [#allocation3], 1
    %66 = vsyncpa [#allocation4], 1

</llo_original>
